<compile_context>
chip_gen: v7x
topology: tpu7x:2x2x1
jax: 0.10.0
libtpu: 0.0.40
codegen_flags: <defaults>
</compile_context>

<pallas_src>
import math

import jax
import jax.numpy as jnp
from jax.experimental import pallas as pl
from jax.experimental.pallas import tpu as pltpu

# ----- config (matches CombinedMarginLoss __init__; ArcFace branch) ---------
FEAT_DIM = 32      # cfg.feat_dim
NUM_CLASSES = 16   # cfg.num_classes
SCALE = 64.0       # cfg.margin_loss_scale
M1 = 1.0           # cfg.margin_loss_m1
M2 = 0.5           # cfg.margin_loss_m2
M3 = 0.0           # cfg.margin_loss_m3
COS_M = math.cos(M2)
SIN_M = math.sin(M2)
EPS = 1e-12        # torch.nn.functional.normalize eps


def _loss_kernel(logits0_ref, emb_ref, w_ref, labels_ref, per_row_ref):
    """ArcFace margin logits + 2x cross-entropy, per-row loss out."""
    logits0 = logits0_ref[...].astype(jnp.float32)   # (B, C) feat[0]
    emb = emb_ref[...].astype(jnp.float32)            # (B, D) feat[1]
    w = w_ref[...].astype(jnp.float32)                # (C, D) — NOT transposed
    labels = labels_ref[...]                           # (B, 1) int32 (VMEM:
    # labels feed a lane-wise compare against an iota, so a vector home is the
    # natural layout; SMEM would force per-row scalar broadcasts.)

    # --- F.normalize(weight): row-wise rsqrt folded into the RHS ------------
    # x / max(||x||, eps) == x * rsqrt(max(||x||^2, eps^2))
    inv_w = jax.lax.rsqrt(jnp.maximum(
        jnp.sum(w * w, axis=1, keepdims=True), EPS * EPS))           # (C, 1)
    w_n = w * inv_w                                                  # (C, D)

    # --- MXU product: (B,D) x (C,D) contracting both on dim 1 == emb @ w_n^T
    raw = jax.lax.dot_general(
        emb, w_n,
        dimension_numbers=(((1,), (1,)), ((), ())),
        preferred_element_type=jnp.float32)                          # (B, C)

    # --- F.normalize(embeddings): applied on the (B,C) result (row bcast),
    #     so this reduce + rsqrt overlap with the MXU pass.
    inv_e = jax.lax.rsqrt(jnp.maximum(
        jnp.sum(emb * emb, axis=1, keepdims=True), EPS * EPS))       # (B, 1)

    cosine = jnp.clip(raw * inv_e, -1.0, 1.0)                        # (B, C)

    B, C = cosine.shape
    class_ids = jax.lax.broadcasted_iota(jnp.int32, (B, C), 1)
    onehot = class_ids == labels                                     # (B, C)
    # NOTE: wrapper contract guarantees labels >= 0, so torch's
    # `labels != -1` masking is a no-op and is dropped here.

    # --- CombinedMarginLoss margin (static branch, resolved at trace time) --
    if M1 == 1.0 and M3 == 0.0:
        # ArcFace: cos(arccos(x) + m2) = x*cos(m2) - sqrt(1-x^2)*sin(m2),
        # applied to the target column only (elsewhere arccos->cos roundtrips
        # to x since x is clamped to [-1, 1]).
        sin_t = jnp.sqrt(jnp.maximum(1.0 - cosine * cosine, 0.0))
        tgt_val = cosine * COS_M - sin_t * SIN_M
    elif M3 > 0.0:
        # CosFace: target - m3.
        tgt_val = cosine - M3
    else:
        raise ValueError("Unsupported margin values.")
    margin_logits = jnp.where(onehot, tgt_val, cosine) * SCALE       # (B, C)

    # --- CE branch 1 (feat[0] logits): stabilized logsumexp -----------------
    m0 = jnp.max(logits0, axis=1, keepdims=True)                     # (B, 1)
    lse0 = m0 + jnp.log(jnp.sum(jnp.exp(logits0 - m0), axis=1, keepdims=True))
    tgt0 = jnp.sum(jnp.where(onehot, logits0, 0.0), axis=1, keepdims=True)

    # --- CE branch 2 (margin logits): keep the max-sub guard (one extra vreg
    #     max/sub — free, and protects configs with scale > ~88 from fp32
    #     exp overflow).
    mm = jnp.max(margin_logits, axis=1, keepdims=True)               # (B, 1)
    lse_m = mm + jnp.log(jnp.sum(jnp.exp(margin_logits - mm),
                                 axis=1, keepdims=True))
    tgt_m = jnp.sum(jnp.where(onehot, margin_logits, 0.0),
                    axis=1, keepdims=True)

    # per-row sum of both CE terms; batch mean happens in the wrapper.
    per_row_ref[...] = (lse0 - tgt0) + (lse_m - tgt_m)               # (B, 1)


def cross_entropy_combined_margin_loss(logits, feat_fusion, weight, labels):
    """Pallas equivalent of CrossEntropyLoss_CombinedMarginLoss.forward.

    Args:
      logits:      (B, C) float — feat[0]
      feat_fusion: (B, D) float — feat[1]
      weight:      (C, D) float — CombinedMarginLoss.weight (no transpose)
      labels:      (B,)   int32 class indices (>= 0)
    Returns:
      (total_loss scalar, logits passthrough)
    """
    B = logits.shape[0]
    labels2d = labels.astype(jnp.int32).reshape(-1, 1)
    per_row = pl.pallas_call(
        _loss_kernel,
        out_shape=jax.ShapeDtypeStruct((B, 1), jnp.float32),
        in_specs=[
            pl.BlockSpec(memory_space=pltpu.MemorySpace.VMEM),  # logits (B, C)
            pl.BlockSpec(memory_space=pltpu.MemorySpace.VMEM),  # emb    (B, D)
            pl.BlockSpec(memory_space=pltpu.MemorySpace.VMEM),  # weight (C, D)
            pl.BlockSpec(memory_space=pltpu.MemorySpace.VMEM),  # labels (B, 1)
        ],
        out_specs=pl.BlockSpec(memory_space=pltpu.MemorySpace.VMEM),
    )(logits, feat_fusion, weight, labels2d)
    # mean over batch of each CE == sum(per_row)/B ; tiny XLA reduce outside.
    total_loss = jnp.sum(per_row) / B
    return total_loss, logits


# ----------------------------- reference (plain JAX) ------------------------
def _reference(logits, feat_fusion, weight, labels):
    def ce(lg, lab):
        lse = jax.scipy.special.logsumexp(lg, axis=1)
        tgt = jnp.take_along_axis(lg, lab[:, None], axis=1)[:, 0]
        return jnp.mean(lse - tgt)

    emb_n = feat_fusion / jnp.maximum(
        jnp.linalg.norm(feat_fusion, axis=1, keepdims=True), EPS)
    w_n = weight / jnp.maximum(
        jnp.linalg.norm(weight, axis=1, keepdims=True), EPS)
    cosine = jnp.clip(emb_n @ w_n.T, -1.0, 1.0)
    theta = jnp.arccos(cosine)
    onehot = jax.nn.one_hot(labels, cosine.shape[1], dtype=jnp.bool_)
    theta_m = jnp.where(onehot, theta + M2, theta)
    margin_logits = jnp.cos(theta_m) * SCALE
    return ce(logits, labels) + ce(margin_logits, labels)


if __name__ == "__main__":
    B = 8
    key = jax.random.PRNGKey(0)
    k1, k2, k3, k4 = jax.random.split(key, 4)

    logits = jax.random.normal(k1, (B, NUM_CLASSES), dtype=jnp.float32)
    feat_fusion = jax.random.normal(k2, (B, FEAT_DIM), dtype=jnp.float32)
    # torch.normal(0, 0.01, (out_features, in_features))
    weight = 0.01 * jax.random.normal(k3, (NUM_CLASSES, FEAT_DIM),
                                      dtype=jnp.float32)
    labels = jax.random.randint(k4, (B,), 0, NUM_CLASSES, dtype=jnp.int32)

    total_loss, logits_out = cross_entropy_combined_margin_loss(
        logits, feat_fusion, weight, labels)
    total_loss = jax.block_until_ready(total_loss)

    ref = _reference(logits, feat_fusion, weight, labels)
    assert jnp.allclose(total_loss, ref, atol=1e-3, rtol=1e-3), (total_loss, ref)
    assert logits_out.shape == (B, NUM_CLASSES)

    print("KERNEL_OK")
</pallas_src>

<mosaic_0001>
module attributes {stable_mosaic.version = 11 : i64} {
  func.func @_loss_kernel(%arg0: memref<8x16xf32, #tpu.memory_space<vmem>>, %arg1: memref<8x32xf32, #tpu.memory_space<vmem>>, %arg2: memref<16x32xf32, #tpu.memory_space<vmem>>, %arg3: memref<8x1xi32, #tpu.memory_space<vmem>>, %arg4: memref<8x1xf32, #tpu.memory_space<vmem>>) attributes {dimension_semantics = [], scalar_prefetch = 0 : i64, scratch_operands = 0 : i64, tpu.core_type = #tpu.core_type<tc>} {
    %c0 = arith.constant 0 : index
    %c0_0 = arith.constant 0 : index
    %0 = vector.load %arg0[%c0, %c0_0] : memref<8x16xf32, #tpu.memory_space<vmem>>, vector<8x16xf32>
    %c0_1 = arith.constant 0 : index
    %c0_2 = arith.constant 0 : index
    %1 = vector.load %arg1[%c0_1, %c0_2] : memref<8x32xf32, #tpu.memory_space<vmem>>, vector<8x32xf32>
    %c0_3 = arith.constant 0 : index
    %c0_4 = arith.constant 0 : index
    %2 = vector.load %arg2[%c0_3, %c0_4] : memref<16x32xf32, #tpu.memory_space<vmem>>, vector<16x32xf32>
    %c0_5 = arith.constant 0 : index
    %c0_6 = arith.constant 0 : index
    %3 = vector.load %arg3[%c0_5, %c0_6] : memref<8x1xi32, #tpu.memory_space<vmem>>, vector<8x1xi32>
    %4 = arith.mulf %2, %2 : vector<16x32xf32>
    %cst = arith.constant dense<0.000000e+00> : vector<16xf32>
    %5 = vector.multi_reduction <add>, %4, %cst [1] : vector<16x32xf32> to vector<16xf32>
    %6 = vector.shape_cast %5 : vector<16xf32> to vector<16x1xf32>
    %cst_7 = arith.constant 1.000000e-24 : f32
    %7 = vector.broadcast %cst_7 : f32 to vector<16x1xf32>
    %8 = arith.maximumf %6, %7 : vector<16x1xf32>
    %9 = math.rsqrt %8 : vector<16x1xf32>
    %10 = vector.broadcast %9 : vector<16x1xf32> to vector<16x32xf32>
    %11 = arith.mulf %2, %10 : vector<16x32xf32>
    %cst_8 = arith.constant dense<0.000000e+00> : vector<8x16xf32>
    %12 = tpu.matmul %1, %11, %cst_8 {dimension_numbers = #tpu.dot_dimension_numbers<[1], [1], [0], [0], [0, 0, 1, 0], [], []>} : vector<8x32xf32>, vector<16x32xf32>, vector<8x16xf32> -> vector<8x16xf32>
    %13 = arith.mulf %1, %1 : vector<8x32xf32>
    %cst_9 = arith.constant dense<0.000000e+00> : vector<8xf32>
    %14 = vector.multi_reduction <add>, %13, %cst_9 [1] : vector<8x32xf32> to vector<8xf32>
    %15 = vector.shape_cast %14 : vector<8xf32> to vector<8x1xf32>
    %cst_10 = arith.constant 1.000000e-24 : f32
    %16 = vector.broadcast %cst_10 : f32 to vector<8x1xf32>
    %17 = arith.maximumf %15, %16 : vector<8x1xf32>
    %18 = math.rsqrt %17 : vector<8x1xf32>
    %19 = vector.broadcast %18 : vector<8x1xf32> to vector<8x16xf32>
    %20 = arith.mulf %12, %19 : vector<8x16xf32>
    %cst_11 = arith.constant -1.000000e+00 : f32
    %cst_12 = arith.constant 1.000000e+00 : f32
    %21 = vector.broadcast %cst_11 : f32 to vector<8x16xf32>
    %22 = arith.maximumf %21, %20 : vector<8x16xf32>
    %23 = vector.broadcast %cst_12 : f32 to vector<8x16xf32>
    %24 = arith.minimumf %23, %22 : vector<8x16xf32>
    %25 = tpu.iota {dimensions = array<i32: 1>} : vector<8x16xi32>
    %26 = vector.broadcast %3 : vector<8x1xi32> to vector<8x16xi32>
    %27 = arith.cmpi eq, %25, %26 : vector<8x16xi32>
    %28 = arith.mulf %24, %24 : vector<8x16xf32>
    %cst_13 = arith.constant 1.000000e+00 : f32
    %29 = vector.broadcast %cst_13 : f32 to vector<8x16xf32>
    %30 = arith.subf %29, %28 : vector<8x16xf32>
    %cst_14 = arith.constant 0.000000e+00 : f32
    %31 = vector.broadcast %cst_14 : f32 to vector<8x16xf32>
    %32 = arith.maximumf %30, %31 : vector<8x16xf32>
    %33 = math.sqrt %32 : vector<8x16xf32>
    %cst_15 = arith.constant 0.87758255 : f32
    %34 = vector.broadcast %cst_15 : f32 to vector<8x16xf32>
    %35 = arith.mulf %24, %34 : vector<8x16xf32>
    %cst_16 = arith.constant 0.47942555 : f32
    %36 = vector.broadcast %cst_16 : f32 to vector<8x16xf32>
    %37 = arith.mulf %33, %36 : vector<8x16xf32>
    %38 = arith.subf %35, %37 : vector<8x16xf32>
    %39 = arith.select %27, %38, %24 : vector<8x16xi1>, vector<8x16xf32>
    %cst_17 = arith.constant 6.400000e+01 : f32
    %40 = vector.broadcast %cst_17 : f32 to vector<8x16xf32>
    %41 = arith.mulf %39, %40 : vector<8x16xf32>
    %cst_18 = arith.constant dense<0xFF800000> : vector<8xf32>
    %42 = vector.multi_reduction <maximumf>, %0, %cst_18 [1] : vector<8x16xf32> to vector<8xf32>
    %43 = vector.shape_cast %42 : vector<8xf32> to vector<8x1xf32>
    %44 = vector.broadcast %43 : vector<8x1xf32> to vector<8x16xf32>
    %45 = arith.subf %0, %44 : vector<8x16xf32>
    %46 = math.exp %45 : vector<8x16xf32>
    %cst_19 = arith.constant dense<0.000000e+00> : vector<8xf32>
    %47 = vector.multi_reduction <add>, %46, %cst_19 [1] : vector<8x16xf32> to vector<8xf32>
    %48 = vector.shape_cast %47 : vector<8xf32> to vector<8x1xf32>
    %49 = math.log %48 : vector<8x1xf32>
    %50 = arith.addf %43, %49 : vector<8x1xf32>
    %cst_20 = arith.constant 0.000000e+00 : f32
    %51 = vector.broadcast %cst_20 : f32 to vector<8x16xf32>
    %52 = arith.select %27, %0, %51 : vector<8x16xi1>, vector<8x16xf32>
    %cst_21 = arith.constant dense<0.000000e+00> : vector<8xf32>
    %53 = vector.multi_reduction <add>, %52, %cst_21 [1] : vector<8x16xf32> to vector<8xf32>
    %54 = vector.shape_cast %53 : vector<8xf32> to vector<8x1xf32>
    %cst_22 = arith.constant dense<0xFF800000> : vector<8xf32>
    %55 = vector.multi_reduction <maximumf>, %41, %cst_22 [1] : vector<8x16xf32> to vector<8xf32>
    %56 = vector.shape_cast %55 : vector<8xf32> to vector<8x1xf32>
    %57 = vector.broadcast %56 : vector<8x1xf32> to vector<8x16xf32>
    %58 = arith.subf %41, %57 : vector<8x16xf32>
    %59 = math.exp %58 : vector<8x16xf32>
    %cst_23 = arith.constant dense<0.000000e+00> : vector<8xf32>
    %60 = vector.multi_reduction <add>, %59, %cst_23 [1] : vector<8x16xf32> to vector<8xf32>
    %61 = vector.shape_cast %60 : vector<8xf32> to vector<8x1xf32>
    %62 = math.log %61 : vector<8x1xf32>
    %63 = arith.addf %56, %62 : vector<8x1xf32>
    %cst_24 = arith.constant 0.000000e+00 : f32
    %64 = vector.broadcast %cst_24 : f32 to vector<8x16xf32>
    %65 = arith.select %27, %41, %64 : vector<8x16xi1>, vector<8x16xf32>
    %cst_25 = arith.constant dense<0.000000e+00> : vector<8xf32>
    %66 = vector.multi_reduction <add>, %65, %cst_25 [1] : vector<8x16xf32> to vector<8xf32>
    %67 = vector.shape_cast %66 : vector<8xf32> to vector<8x1xf32>
    %68 = arith.subf %50, %54 : vector<8x1xf32>
    %69 = arith.subf %63, %67 : vector<8x1xf32>
    %70 = arith.addf %68, %69 : vector<8x1xf32>
    %c0_26 = arith.constant 0 : index
    %c0_27 = arith.constant 0 : index
    %71 = vector.load %arg4[%c0_26, %c0_27] : memref<8x1xf32, #tpu.memory_space<vmem>>, vector<8x1xf32>
    tpu.vector_store %arg4[%c0_26, %c0_27], %70 {strides = array<i32>} : memref<8x1xf32, #tpu.memory_space<vmem>>, vector<8x1xf32>,
    return
  }
}

</mosaic_0001>

<llo_original>
// kernel: tpu_custom_call.1
$region0: #{tpu_custom_call.1}
  #allocation0 [shape = 'u32[]', space=smem, size = 0x4, offset = 0x4, fixed_abs, tag = 'smem constant byte address 0x4 - core index']
  #allocation1 [shape = 'u32[144,128]{1,0:T(1,128)}', space=vmem, size = 0x12000, scoped, tag = 'internal scratch']
  %s0 = inlined_call_operand.hbm [shape: f32[8,16], index: 0, kind: input, shape index: {}]
  %s1 = inlined_call_operand.hbm [shape: f32[8,32], index: 1, kind: input, shape index: {}]
  %s2 = inlined_call_operand.vmem [shape: f32[16,32], index: 2, kind: input, shape index: {}]
  %s3 = inlined_call_operand.vmem [shape: s32[8,1], index: 3, kind: input, shape index: {}]
  %s4 = inlined_call_operand.vmem [shape: f32[8,1], index: 4, kind: output, shape index: {}]
  %s5 = sld [smem:[#allocation0]]
  $region34: #{tpu_custom_call.1} parent=0
    _
  %s7 = ssub.s32 1, %s5
  %s8 = scalar_select 0, %s7, %s5
  $region1: #{tpu_custom_call.1} parent=0
    #allocation2 [shape = 'u8[4096]{0}', space=vmem, size = 0x1000, scoped, tag = 'input window, operand 0, single buffered']
    #allocation3 [shape = 's32[1]{0}', space=sflag, size = 0x4, scoped, tag = 'scoped memory for tpu_custom_call.1']
    #allocation4 [shape = 'u8[4096]{0}', space=vmem, size = 0x1000, scoped, tag = 'input window, operand 1, single buffered']
    #allocation5 [shape = 's32[1]{0}', space=sflag, size = 0x4, scoped, tag = 'scoped memory for tpu_custom_call.1']
    %9 = vsyncpa [#allocation3], 0
    %10 = vsyncpa [#allocation5], 0
    // Predicated region
    $region2: #{tpu_custom_call.1} parent=1 // pred_check
      _
    $region3: #{tpu_custom_call.1} parent=1 // pred_check_branch
      %12 = sbr.rel (0) target = $region5
    $region4: #{tpu_custom_call.1} parent=1 // pred_region
      %s14 = ssub.s32 128, 128
      %15 = vsyncadd [#allocation3], %s14
      %s17 = sshll.u32 [#allocation2], 4
      %s18 = int_to_ptr.vmem [resolvable:$true] %s17
      %20 = dma.hbm_to_vmem [thread:$0]  %s0, 128, %s18, [#allocation3]
    $region5: #{tpu_custom_call.1} parent=1 // pred_fallthru
      _
    // Predicated region
    $region6: #{tpu_custom_call.1} parent=1 // pred_check
      _
    $region7: #{tpu_custom_call.1} parent=1 // pred_check_branch
      %22 = sbr.rel (0) target = $region9
    $region8: #{tpu_custom_call.1} parent=1 // pred_region
      %s24 = ssub.s32 128, 128
      %25 = vsyncadd [#allocation5], %s24
      %s27 = sshll.u32 [#allocation4], 4
      %s28 = int_to_ptr.vmem [resolvable:$true] %s27
      %30 = dma.hbm_to_vmem [thread:$0]  %s1, 128, %s28, [#allocation5]
    $region9: #{tpu_custom_call.1} parent=1 // pred_fallthru
      _
    // Predicated region
    $region10: #{tpu_custom_call.1} parent=1 // pred_check
      _
    $region11: #{tpu_custom_call.1} parent=1 // pred_check_branch
      %32 = sbr.rel (0) target = $region13
    $region12: #{tpu_custom_call.1} parent=1 // pred_region
      _
    $region13: #{tpu_custom_call.1} parent=1 // pred_fallthru
      _
    // Predicated region
    $region14: #{tpu_custom_call.1} parent=1 // pred_check
      _
    $region15: #{tpu_custom_call.1} parent=1 // pred_check_branch
      %34 = sbr.rel (0) target = $region17
    $region16: #{tpu_custom_call.1} parent=1 // pred_region
      _
    $region17: #{tpu_custom_call.1} parent=1 // pred_fallthru
      _
    // Predicated region
    $region18: #{tpu_custom_call.1} parent=1 // pred_check
      _
    $region19: #{tpu_custom_call.1} parent=1 // pred_check_branch
      %36 = sbr.rel (0) target = $region21
    $region20: #{tpu_custom_call.1} parent=1 // pred_region
      %37 = dma.done [#allocation3], 128
    $region21: #{tpu_custom_call.1} parent=1 // pred_fallthru
      _
    // Predicated region
    $region22: #{tpu_custom_call.1} parent=1 // pred_check
      _
    $region23: #{tpu_custom_call.1} parent=1 // pred_check_branch
      %39 = sbr.rel (0) target = $region25
    $region24: #{tpu_custom_call.1} parent=1 // pred_region
      %40 = dma.done [#allocation5], 128
    $region25: #{tpu_custom_call.1} parent=1 // pred_fallthru
      _
    %v41 = vld [vmem:[#allocation2] sm:$0xff]
    %v42 = vld [vmem:[#allocation4] sm:$0xff]
    %v43 = vld [vmem:[%s2] sm:$0xff]
    %v44 = vld [vmem:[%s2 + $0x8] sm:$0xff]
    %v45 = vld [vmem:[%s3] sm:$0xff]
    %v46 = vmul.f32 %v43, %v43
    %v47 = vmul.f32 %v44, %v44
    %vm48 = vcmask 261120
    %v49 = vsel %vm48, %v46, 0.0
    %50 = vadd.xlane.f32.xlu0 %v49
    %v51 = vpop.xlane.xlu0 %50
    %v52 = vsel %vm48, %v47, 0.0
    %53 = vadd.xlane.f32.xlu0 %v52
    %v54 = vpop.xlane.xlu0 %53
    %v55 = vmax.f32 %v51, 1e-24
    %v56 = vmax.f32 %v54, 1e-24
    %v57 = vrsqrt.pop %v55
    %v58 = vrsqrt.pop %v56
    %v59 = vmul.f32 %v43, %v57
    %v60 = vmul.f32 %v44, %v58
    %v62 = vsel %vm48, %v42, 0
    %v65 = vsel %vm48, %v59, 0
    %v68 = vsel %vm48, %v60, 0
    %70 = vmatprep.subr.mxu0 0.0
    %71 = vmatpush1.xpose.msra.mxu0 %v65
    %72 = vmatprep.subr.mxu0 0.0
    %73 = vmatpush1.xpose.msra.mxu0 %v68
    %74 = vmatprep.subr.mxu0 0.0
    %75 = vmatpush1.xpose.msra.mxu0 0.0
    %76 = vmatprep.subr.mxu0 0.0
    %77 = vmatpush1.xpose.msra.mxu0 0.0
    %78 = vmatprep.subr.mxu0 0.0
    %79 = vmatpush1.xpose.msra.mxu0 0.0
    %80 = vmatprep.subr.mxu0 0.0
    %81 = vmatpush1.xpose.msra.mxu0 0.0
    %82 = vmatprep.subr.mxu0 0.0
    %83 = vmatpush1.xpose.msra.mxu0 0.0
    %84 = vmatprep.subr.mxu0 0.0
    %85 = vmatpush1.xpose.msra.mxu0 0.0
    %86 = vmatprep.subr.mxu0 0.0
    %87 = vmatpush1.xpose.msra.mxu0 0.0
    %88 = vmatprep.subr.mxu0 0.0
    %89 = vmatpush1.xpose.msra.mxu0 0.0
    %90 = vmatprep.subr.mxu0 0.0
    %91 = vmatpush1.xpose.msra.mxu0 0.0
    %92 = vmatprep.subr.mxu0 0.0
    %93 = vmatpush1.xpose.msra.mxu0 0.0
    %94 = vmatprep.subr.mxu0 0.0
    %95 = vmatpush1.xpose.msra.mxu0 0.0
    %96 = vmatprep.subr.mxu0 0.0
    %97 = vmatpush1.xpose.msra.mxu0 0.0
    %98 = vmatprep.subr.mxu0 0.0
    %99 = vmatpush1.xpose.msra.mxu0 0.0
    %100 = vmatprep.subr.mxu0 0.0
    %101 = vmatpush1.xpose.msra.mxu0 0.0
    %102 = vmatprep.subr.mxu0 0.0
    %103 = vmatpush1.xpose.msra.mxu0 0.0
    %104 = vmatprep.subr.mxu0 0.0
    %105 = vmatpush1.xpose.msra.mxu0 0.0
    %106 = vmatprep.subr.mxu0 0.0
    %107 = vmatpush1.xpose.msra.mxu0 0.0
    %108 = vmatprep.subr.mxu0 0.0
    %109 = vmatpush1.xpose.msra.mxu0 0.0
    %110 = vmatprep.subr.mxu0 0.0
    %111 = vmatpush1.xpose.msra.mxu0 0.0
    %112 = vmatprep.subr.mxu0 0.0
    %113 = vmatpush1.xpose.msra.mxu0 0.0
    %114 = vmatprep.subr.mxu0 0.0
    %115 = vmatpush1.xpose.msra.mxu0 0.0
    %116 = vmatprep.subr.mxu0 0.0
    %117 = vmatpush1.xpose.msra.mxu0 0.0
    %118 = vmatprep.subr.mxu0 0.0
    %119 = vmatpush1.xpose.msra.mxu0 0.0
    %120 = vmatprep.subr.mxu0 0.0
    %121 = vmatpush1.xpose.msra.mxu0 0.0
    %122 = vmatprep.subr.mxu0 0.0
    %123 = vmatpush1.xpose.msra.mxu0 0.0
    %124 = vmatprep.subr.mxu0 0.0
    %125 = vmatpush1.xpose.msra.mxu0 0.0
    %126 = vmatprep.subr.mxu0 0.0
    %127 = vmatpush1.xpose.msra.mxu0 0.0
    %128 = vmatprep.subr.mxu0 0.0
    %129 = vmatpush1.xpose.msra.mxu0 0.0
    %130 = vmatprep.subr.mxu0 0.0
    %131 = vmatpush1.xpose.msra.mxu0 0.0
    %132 = vmatprep.subr.mxu0 0.0
    %133 = vmatpush1.xpose.msra.mxu0 0.0
    %134 = vmatprep.mubr.f32.mxu0 0.0
    %135 = vmatmul.mubr.f32.gmra.mrb[0].mxu0 %v62
    %v136 = vpop.f32.mrb[0].mxu0
    %v137 = vadd.f32 0.0, %v136
    %v138 = vpop.f32.mrb[0].mxu0
    %139 = vdwg.mxu0
    %v140 = vmul.f32 %v42, %v42
    %v141 = vsel %vm48, %v140, 0.0
    %142 = vadd.xlane.f32.xlu0 %v141
    %v143 = vpop.xlane.xlu0 %142
    %v144 = vmax.f32 %v143, 1e-24
    %v145 = vrsqrt.pop %v144
    %v146 = vmul.f32 %v137, %v145
    %v147 = vmax.f32 %v146, -1.0
    %v148 = vmin.f32 %v147, 1.0
    %v149 = vlaneseq
    %v150 = vand.u32 %v149, 127
    %151 = vset.pattern.permute.xlu0 0
    %152 = vperm.xlu0 %151, %v45
    %v153 = vpop.permute.xlu0 %152
    %vm154 = vcmp.eq.s32.totalorder %v150, %v153
    %v155 = vmul.f32 %v148, %v148
    %v156 = vsub.f32 1.0, %v155
    %v157 = vmax.f32 %v156, 0.0
    %v158 = vrsqrt.pop %v157
    %v159 = vmul.f32 %v157, %v158
    %vm160 = vcmp.eq.f32.partialorder %v157, inf
    %v161 = vsel %vm160, %v157, %v159
    %vm162 = vcmp.eq.f32.partialorder %v157, 0.0
    %v163 = vand.u32 %v157, 2147483648
    %v164 = vsel %vm162, %v163, %v161
    %v165 = vmul.f32 %v148, 0.87758255
    %v166 = vmul.f32 %v164, 0.47942555
    %v167 = vsub.f32 %v165, %v166
    %v168 = vsel %vm154, %v167, %v148
    %v169 = vmul.f32 %v168, 64.0
    %vm170 = vcmask 130048
    %v171 = vsel %vm170, %v41, -inf
    %172 = vmax.xlane.f32.xlu0 %v171
    %v173 = vpop.xlane.xlu0 %172
    %v174 = vsub.f32 %v41, %v173
    %v175 = vmul.f32 %v174, 1.442695
    %v176 = vpow.pop %v175
    %v177 = vsel %vm170, %v176, 0.0
    %178 = vadd.xlane.f32.xlu0 %v177
    %v179 = vpop.xlane.xlu0 %178
    %v180 = vlog2.pop %v179
    %v181 = vmul.f32 %v180, 0.6931472
    %v182 = vadd.f32 %v173, %v181
    %v183 = vsel %vm154, %v41, 0.0
    %v184 = vsel %vm170, %v183, 0.0
    %185 = vadd.xlane.f32.xlu0 %v184
    %v186 = vpop.xlane.xlu0 %185
    %v187 = vsel %vm170, %v169, -inf
    %188 = vmax.xlane.f32.xlu0 %v187
    %v189 = vpop.xlane.xlu0 %188
    %v190 = vsub.f32 %v169, %v189
    %v191 = vmul.f32 %v190, 1.442695
    %v192 = vpow.pop %v191
    %v193 = vsel %vm170, %v192, 0.0
    %194 = vadd.xlane.f32.xlu0 %v193
    %v195 = vpop.xlane.xlu0 %194
    %v196 = vlog2.pop %v195
    %v197 = vmul.f32 %v196, 0.6931472
    %v198 = vadd.f32 %v189, %v197
    %v199 = vsel %vm154, %v169, 0.0
    %v200 = vsel %vm170, %v199, 0.0
    %201 = vadd.xlane.f32.xlu0 %v200
    %v202 = vpop.xlane.xlu0 %201
    %v203 = vsub.f32 %v182, %v186
    %v204 = vsub.f32 %v198, %v202
    %v205 = vadd.f32 %v203, %v204
    %vm206 = vcmask 7168
    %207 = vst.msk [vmem:[%s4] sm:$0xff] %vm206, %v205
    // Predicated region
    $region26: #{tpu_custom_call.1} parent=1 // pred_check
      _
    $region27: #{tpu_custom_call.1} parent=1 // pred_check_branch
      %209 = sbr.rel (0) target = $region29
    $region28: #{tpu_custom_call.1} parent=1 // pred_region
      _
    $region29: #{tpu_custom_call.1} parent=1 // pred_fallthru
      _
    // Predicated region
    $region30: #{tpu_custom_call.1} parent=1 // pred_check
      _
    $region31: #{tpu_custom_call.1} parent=1 // pred_check_branch
      %211 = sbr.rel (0) target = $region33
    $region32: #{tpu_custom_call.1} parent=1 // pred_region
      _
    $region33: #{tpu_custom_call.1} parent=1 // pred_fallthru
      _
    %212 = vsyncpa [#allocation3], 1
    %213 = vsyncpa [#allocation5], 1

</llo_original>
